<compile_context>
chip_gen: v6e
topology: v6e:2x2x1
jax: 0.10.0
libtpu: 0.0.40
codegen_flags: <defaults>
</compile_context>

<pallas_src>
import functools

import jax
import jax.numpy as jnp
from jax.experimental import pallas as pl
from jax.experimental.pallas import tpu as pltpu


# VMEM sizing: budget the per-step working set for the smallest-VMEM target
# (v7x: 64 MiB physical per TensorCore); v5e/v6e (128 MiB) have extra headroom.
_VMEM_BUDGET_BYTES = 40 * 1024 * 1024   # target per-step working set used for block sizing
_VMEM_LIMIT_BYTES = 48 * 1024 * 1024    # explicit scoped-VMEM limit handed to Mosaic


# --------------------------------------------------------------------------------------
# Kernels
# --------------------------------------------------------------------------------------

def _attn_pool_kernel(x_ref, mask_ref, wscore_ref, bscore_ref, wv_ref, bv_ref,
                      out_ref, *, approx_softmax):
    TB, N, C = x_ref.shape
    H, _, Dh = wv_ref.shape

    x = x_ref[...]                                         # (TB, N, C)  compute dtype

    # Per-head attention logits; the q and k projections were pre-folded into
    # wscore / bscore in the wrapper.  N is padded to a sublane-tile multiple by the
    # wrapper, so the reshape below is a free collapse (no relayout copy).
    s = jnp.dot(x.reshape(TB * N, C), wscore_ref[...],
                preferred_element_type=jnp.float32)        # (TB*N, H)  fp32
    # Lane-dense softmax layout: tokens on lanes.
    s = jnp.swapaxes(s.reshape(TB, N, H), 1, 2)            # (TB, H, N)
    s = s + bscore_ref[...]                                # + (H, 1)

    # masked_fill(mask == 0, -1e20) + softmax over tokens, fp32 on the VPU/EUP.
    keep = mask_ref[...] != 0.0                            # (TB, 1, N)
    s = jnp.where(keep, s, -1e20)
    s = s - jnp.max(s, axis=2, keepdims=True)
    p = jnp.exp(s)
    denom = jnp.sum(p, axis=2, keepdims=True)              # (TB, H, 1)
    if approx_softmax:
        p = p * pl.reciprocal(denom, approx=True)
    else:
        p = p / denom

    # Pool the raw tokens per head, THEN project the pooled rows through wv.  Exact
    # because each softmax row sums to one (so bv is added exactly once below).
    a = jnp.einsum("bhn,bnc->bhc", p.astype(x.dtype), x,
                   preferred_element_type=jnp.float32)     # (TB, H, C)  fp32

    # Per-head v projection: only the head-diagonal Dh columns of wv survive the head
    # select, so compute just those (H small GEMMs; no hsel multiply / reduce).
    for h in range(H):
        a_h = a[:, h, :].astype(wv_ref.dtype)              # (TB, C)
        o_h = jnp.dot(a_h, wv_ref[h],
                      preferred_element_type=jnp.float32)  # (TB, Dh)
        out_ref[:, h * Dh:(h + 1) * Dh] = (o_h + bv_ref[h:h + 1, :]).astype(out_ref.dtype)


def _proj_mlp_kernel(p_ref, wproj_ref, bproj_ref, w1_ref, b1_ref, w2_ref, b2_ref,
                     out_ref, y_ref, acc_ref):
    # grid = (batch tiles ["parallel"], hidden tiles ["arbitrary", reduction axis, last]).
    f = pl.program_id(1)

    @pl.when(f == 0)
    def _():
        y = jnp.dot(p_ref[...].astype(wproj_ref.dtype), wproj_ref[...],
                    preferred_element_type=jnp.float32) + bproj_ref[...]
        y_ref[...] = y
        acc_ref[...] = jnp.zeros_like(acc_ref)

    h = jnp.dot(y_ref[...].astype(w1_ref.dtype), w1_ref[...],
                preferred_element_type=jnp.float32) + b1_ref[...]
    h = jax.nn.gelu(h, approximate=False)
    acc_ref[...] += jnp.dot(h.astype(w2_ref.dtype), w2_ref[...],
                            preferred_element_type=jnp.float32)

    @pl.when(f == pl.num_programs(1) - 1)
    def _():
        out_ref[...] = (y_ref[...] + acc_ref[...] + b2_ref[...]).astype(out_ref.dtype)


# --------------------------------------------------------------------------------------
# VMEM-budget-driven block sizing
# --------------------------------------------------------------------------------------

def _attn_step_bytes(tb, n, c, h, itemsize):
    x_blk = 2 * tb * n * c * itemsize               # x stream, double-buffered
    mask_blk = 2 * tb * n * 4                       # (tb, 1, n) fp32 mask stream
    out_blk = 2 * tb * c * 4                        # (tb, c) fp32 output stream
    # Grid-invariant operands (wscore, bscore, wv_heads, bv_heads); still double-buffered
    # by the default pipeline.  TODO(synk): pl.Buffered(1) would halve this.
    weights = 2 * ((c * h + c * c) * itemsize + (2 * h + c) * 4)
    # fp32 temporaries: scores/probs (tb, h, n) and the pooled (tb, h, c) block.
    temps = 4 * tb * h * n * 4 + 2 * tb * h * c * 4
    return x_blk + mask_blk + out_blk + weights + temps


def _pick_block_b(B, n, c, h, itemsize, budget):
    """Batch rows per grid step: a divisor of B that is sublane-legal ((TB, C) blocks need
    TB % 8 == 0 or TB == B), fits the VMEM budget, and -- when possible -- leaves a grid
    of length >= 2 so the 'parallel' axis can be split across v7x's two TensorCores."""
    legal = [d for d in range(B, 0, -1) if B % d == 0 and (d % 8 == 0 or d == B)]
    fitting = [d for d in legal if _attn_step_bytes(d, n, c, h, itemsize) <= budget]
    if fitting:
        multi = [d for d in fitting if B // d >= 2]
        return multi[0] if multi else fitting[0]
    return legal[-1]    # nothing fits the soft budget; fall back to the smallest legal tile


def _pick_mlp_block_b(B):
    """Batch tile for the MLP kernel: prefer >= 2 sublane-aligned tiles (v7x: 2 TCs)."""
    for d in range(B // 2, 7, -1):
        if B % d == 0 and d % 8 == 0:
            return d
    return B


def _mlp_step_bytes(tf, c, tbm, itemsize):
    w_tiles = 2 * 2 * c * tf * itemsize                       # w1 + w2 tiles, double-buffered
    invariant = 2 * (c * c * itemsize + (3 * c + tf) * 4 + tbm * c * 4)
    resident = 4 * tbm * c * 4                                # y / acc scratches + out block
    temps = 2 * tbm * tf * 4
    return w_tiles + invariant + resident + temps


def _pick_block_f(Fh, c, tbm, itemsize, budget):
    """Hidden-dim tile (reduction axis): the largest lane-legal divisor that fits VMEM."""
    legal = [t for t in range(Fh, 0, -1) if Fh % t == 0 and (t % 128 == 0 or t == Fh)]
    for t in legal:
        if _mlp_step_bytes(t, c, tbm, itemsize) <= budget:
            return t
    return legal[-1]


# --------------------------------------------------------------------------------------
# Wrapper
# --------------------------------------------------------------------------------------

def masked_attention_pool_latent(x, mask, params, *, num_heads,
                                 compute_dtype=jnp.bfloat16, approx_softmax=False):
    """Forward pass of MaskedAttentionPoolLatent (latent_len=1, pool_type='token',
    qk_norm=False, norm_layer=None, dropout inactive).  Returns (B, C) float32."""
    B, N, C = x.shape
    H = num_heads
    assert C % H == 0
    Dh = C // H
    L = params["latent"].shape[1]
    assert L == 1, "optimized kernel implements latent_len == 1 (module default)"

    f32 = jnp.float32
    cdt = jnp.dtype(compute_dtype)
    itemsize = cdt.itemsize

    wq, bq = params["wq"].astype(f32), params["bq"].astype(f32)
    wkv, bkv = params["wkv"].astype(f32), params["bkv"].astype(f32)
    wk, bk = wkv[:, :C], bkv[:, :C]
    wv, bv = wkv[:, C:], bkv[:, C:]

    # Hoisted, batch-invariant q projection (pre-scaled), folded into the k projection:
    #   scores[b, n, h] = x[b, n, :] @ wscore[:, h] + bscore[h]
    q = (params["latent"].reshape(L, C).astype(f32) @ wq + bq) * (Dh ** -0.5)  # (1, C)
    q_h = q.reshape(H, Dh)
    wscore = jnp.einsum("chd,hd->ch", wk.reshape(C, H, Dh), q_h)               # (C, H)
    bscore = jnp.einsum("hd,hd->h", bk.reshape(H, Dh), q_h).reshape(H, 1)      # (H, 1)

    # Per-head wv / bv slices so the kernel never lane-slices the (C, C) weight.
    wv_heads = jnp.transpose(wv.reshape(C, H, Dh), (1, 0, 2))                  # (H, C, Dh)
    bv_heads = bv.reshape(H, Dh)                                               # (H, Dh)

    # Pad N to a sublane-tile multiple (8 fp32 / 16 bf16) so the in-kernel
    # (TB, N, C) -> (TB*N, C) collapse is free.  Padded tokens are masked out.
    sub = 8 * (4 // itemsize)
    Np = -(-N // sub) * sub
    x_c = x.astype(cdt)
    mask3 = mask.reshape(B, 1, N).astype(f32)
    if Np != N:
        x_c = jnp.pad(x_c, ((0, 0), (0, Np - N), (0, 0)))
        mask3 = jnp.pad(mask3, ((0, 0), (0, 0), (0, Np - N)))

    TB = _pick_block_b(B, Np, C, H, itemsize, _VMEM_BUDGET_BYTES)

    pooled = pl.pallas_call(
        functools.partial(_attn_pool_kernel, approx_softmax=approx_softmax),
        out_shape=jax.ShapeDtypeStruct((B, C), f32),
        grid_spec=pltpu.PrefetchScalarGridSpec(
            num_scalar_prefetch=0,
            grid=(B // TB,),
            in_specs=[
                pl.BlockSpec((TB, Np, C), lambda b: (b, 0, 0)),    # x (TB batch rows / step)
                pl.BlockSpec((TB, 1, Np), lambda b: (b, 0, 0)),    # mask, tokens on lanes
                pl.BlockSpec((C, H), lambda b: (0, 0)),            # wscore (folded q/k)
                pl.BlockSpec((H, 1), lambda b: (0, 0)),            # bscore
                pl.BlockSpec((H, C, Dh), lambda b: (0, 0, 0)),     # per-head wv slices
                pl.BlockSpec((H, Dh), lambda b: (0, 0)),           # per-head bv slices
            ],
            out_specs=pl.BlockSpec((TB, C), lambda b: (b, 0)),
        ),
        compiler_params=pltpu.CompilerParams(
            dimension_semantics=("parallel",),
            vmem_limit_bytes=_VMEM_LIMIT_BYTES),
    )(x_c, mask3, wscore.astype(cdt), bscore, wv_heads.astype(cdt), bv_heads)

    # ---- output projection + residual MLP, gridded over (batch tiles, hidden tiles) ----
    Fh = params["w1"].shape[1]
    TBm = _pick_mlp_block_b(B)
    TF = _pick_block_f(Fh, C, TBm, itemsize, _VMEM_BUDGET_BYTES)

    y = pl.pallas_call(
        _proj_mlp_kernel,
        out_shape=jax.ShapeDtypeStruct((B, C), f32),
        grid_spec=pltpu.PrefetchScalarGridSpec(
            num_scalar_prefetch=0,
            grid=(B // TBm, Fh // TF),                # reduction (hidden) axis last
            in_specs=[
                pl.BlockSpec((TBm, C), lambda b, f: (b, 0)),   # pooled rows
                pl.BlockSpec((C, C), lambda b, f: (0, 0)),     # wproj
                pl.BlockSpec((1, C), lambda b, f: (0, 0)),     # bproj
                pl.BlockSpec((C, TF), lambda b, f: (0, f)),    # w1 tile
                pl.BlockSpec((1, TF), lambda b, f: (0, f)),    # b1 tile
                pl.BlockSpec((TF, C), lambda b, f: (f, 0)),    # w2 tile
                pl.BlockSpec((1, C), lambda b, f: (0, 0)),     # b2
            ],
            out_specs=pl.BlockSpec((TBm, C), lambda b, f: (b, 0)),
            scratch_shapes=[pltpu.VMEM((TBm, C), f32),         # y (proj output)
                            pltpu.VMEM((TBm, C), f32)],        # MLP accumulator
        ),
        compiler_params=pltpu.CompilerParams(
            dimension_semantics=("parallel", "arbitrary"),
            vmem_limit_bytes=_VMEM_LIMIT_BYTES),
    )(pooled,
      params["wproj"].astype(cdt), params["bproj"].astype(f32),
      params["w1"].astype(cdt), params["b1"].astype(f32),
      params["w2"].astype(cdt), params["b2"].astype(f32))

    return y


# --------------------------------------------------------------------------------------
# Pure-JAX reference + synthetic params (verification only)
# --------------------------------------------------------------------------------------

def reference_forward(x, mask, params, *, num_heads):
    """Pure-JAX reference mirroring the PyTorch forward."""
    B, N, C = x.shape
    Dh = C // num_heads
    latent = params["latent"]                    # (1, L, C)
    L = latent.shape[1]
    lat = jnp.broadcast_to(latent, (B, L, C))
    q = lat @ params["wq"] + params["bq"]        # (B, L, C)
    kv = x @ params["wkv"] + params["bkv"]       # (B, N, 2C)
    k, v = kv[..., :C], kv[..., C:]
    q = q.reshape(B, L, num_heads, Dh).transpose(0, 2, 1, 3) * (Dh ** -0.5)
    k = k.reshape(B, N, num_heads, Dh).transpose(0, 2, 1, 3)
    v = v.reshape(B, N, num_heads, Dh).transpose(0, 2, 1, 3)
    attn = jnp.einsum("bhld,bhnd->bhln", q, k)
    attn = jnp.where(mask[:, None, None, :] == 0, -1e20, attn)
    attn = jax.nn.softmax(attn, axis=-1)
    o = jnp.einsum("bhln,bhnd->bhld", attn, v).transpose(0, 2, 1, 3).reshape(B, L, C)
    y = o @ params["wproj"] + params["bproj"]
    h = jax.nn.gelu(y @ params["w1"] + params["b1"], approximate=False)
    y = y + (h @ params["w2"] + params["b2"])
    return y[:, 0]


def make_params(key, in_dims, num_heads, mlp_ratio=4.0, latent_len=1):
    hidden = int(in_dims * mlp_ratio)
    ks = jax.random.split(key, 10)
    std_lat = in_dims ** (-0.5)
    # Deterministic synthetic init (weights stored as (in, out), applied as x @ W).
    return {
        "latent": jax.random.normal(ks[0], (1, latent_len, in_dims), jnp.float32) * std_lat,
        "wq": jax.random.normal(ks[1], (in_dims, in_dims), jnp.float32) * 0.05,
        "bq": jax.random.normal(ks[2], (1, in_dims), jnp.float32) * 0.01,
        "wkv": jax.random.normal(ks[3], (in_dims, 2 * in_dims), jnp.float32) * 0.05,
        "bkv": jax.random.normal(ks[4], (1, 2 * in_dims), jnp.float32) * 0.01,
        "wproj": jax.random.normal(ks[5], (in_dims, in_dims), jnp.float32) * 0.05,
        "bproj": jax.random.normal(ks[6], (1, in_dims), jnp.float32) * 0.01,
        "w1": jax.random.normal(ks[7], (in_dims, hidden), jnp.float32) * 0.05,
        "b1": jax.random.normal(ks[8], (1, hidden), jnp.float32) * 0.01,
        "w2": jax.random.normal(ks[9], (hidden, in_dims), jnp.float32) * 0.05,
        "b2": jnp.zeros((1, in_dims), jnp.float32),
    }


if __name__ == "__main__":
    key = jax.random.PRNGKey(0)
    kx1, kp1, kx2, kl2, kp2 = jax.random.split(key, 5)

    # ---- small shapes: quick exactness check (fp32, exact softmax) ----
    B, N, C, H = 2, 16, 32, 4
    x = jax.random.normal(kx1, (B, N, C), jnp.float32)
    lengths = jnp.array([16, 10])
    mask = (jnp.arange(N)[None, :] < lengths[:, None]).astype(jnp.float32)
    params = make_params(kp1, C, H)

    ref = reference_forward(x, mask, params, num_heads=H)
    out = masked_attention_pool_latent(x, mask, params, num_heads=H,
                                       compute_dtype=jnp.float32)
    out = jax.block_until_ready(out)
    assert out.shape == (B, C)
    assert jnp.allclose(out, ref, atol=1e-4, rtol=1e-4), "fp32 small-shape mismatch"

    # ---- larger shapes: exercises the gridded batch axis (grid >= 2), realistic
    #      (8,128) tiling, N padding (200 -> sublane multiple), per-head wv slices,
    #      and the gridded proj+MLP kernel ----
    B2, N2, C2, H2 = 16, 200, 256, 8
    x2 = jax.random.normal(kx2, (B2, N2, C2), jnp.float32)
    lengths2 = jax.random.randint(kl2, (B2,), 16, N2 + 1)
    mask2 = (jnp.arange(N2)[None, :] < lengths2[:, None]).astype(jnp.float32)
    params2 = make_params(kp2, C2, H2)
    ref2 = reference_forward(x2, mask2, params2, num_heads=H2)

    out2 = masked_attention_pool_latent(x2, mask2, params2, num_heads=H2,
                                        compute_dtype=jnp.float32)
    out2 = jax.block_until_ready(out2)
    assert jnp.allclose(out2, ref2, atol=3e-3, rtol=3e-3), "fp32 large-shape mismatch"

    # ---- default fast path: bf16 MXU operands, fp32 softmax/accumulation, EUP recip ----
    out2_fast = masked_attention_pool_latent(x2, mask2, params2, num_heads=H2,
                                             approx_softmax=True)   # compute_dtype=bf16
    out2_fast = jax.block_until_ready(out2_fast)
    assert jnp.allclose(out2_fast, ref2, atol=3e-2, rtol=5e-2), "bf16 large-shape mismatch"

    print("KERNEL_OK")
</pallas_src>

<mosaic_0001>
module attributes {stable_mosaic.version = 11 : i64} {
  func.func @_attn_pool_kernel(%arg0: i32, %arg1: memref<2x16x32xf32, #tpu.memory_space<vmem>>, %arg2: memref<2x1x16xf32, #tpu.memory_space<vmem>>, %arg3: memref<32x4xf32, #tpu.memory_space<vmem>>, %arg4: memref<4x1xf32, #tpu.memory_space<vmem>>, %arg5: memref<4x32x8xf32, #tpu.memory_space<vmem>>, %arg6: memref<4x8xf32, #tpu.memory_space<vmem>>, %arg7: memref<2x32xf32, #tpu.memory_space<vmem>>) attributes {dimension_semantics = [#tpu.dimension_semantics<parallel>], iteration_bounds = array<i64: 1>, scalar_prefetch = 0 : i64, scratch_operands = 0 : i64, tpu.core_type = #tpu.core_type<tc>, window_params = [{transform_indices = @transform_0, window_bounds = array<i64: 2, 16, 32>}, {transform_indices = @transform_1, window_bounds = array<i64: 2, 1, 16>}, {pipeline_mode = #tpu.pipeline_mode<synchronous>, transform_indices = @transform_2, window_bounds = array<i64: 32, 4>}, {pipeline_mode = #tpu.pipeline_mode<synchronous>, transform_indices = @transform_3, window_bounds = array<i64: 4, 1>}, {pipeline_mode = #tpu.pipeline_mode<synchronous>, transform_indices = @transform_4, window_bounds = array<i64: 4, 32, 8>}, {pipeline_mode = #tpu.pipeline_mode<synchronous>, transform_indices = @transform_5, window_bounds = array<i64: 4, 8>}, {transform_indices = @transform_6, window_bounds = array<i64: 2, 32>}]} {
    %c0 = arith.constant 0 : index
    %c0_0 = arith.constant 0 : index
    %c0_1 = arith.constant 0 : index
    %0 = vector.load %arg1[%c0, %c0_0, %c0_1] : memref<2x16x32xf32, #tpu.memory_space<vmem>>, vector<2x16x32xf32>
    %1 = vector.shape_cast %0 : vector<2x16x32xf32> to vector<32x32xf32>
    %c0_2 = arith.constant 0 : index
    %c0_3 = arith.constant 0 : index
    %2 = vector.load %arg3[%c0_2, %c0_3] : memref<32x4xf32, #tpu.memory_space<vmem>>, vector<32x4xf32>
    %cst = arith.constant dense<0.000000e+00> : vector<32x4xf32>
    %3 = tpu.matmul %1, %2, %cst {dimension_numbers = #tpu.dot_dimension_numbers<[1], [0], [0], [1], [0, 0, 1, 1], [], []>} : vector<32x32xf32>, vector<32x4xf32>, vector<32x4xf32> -> vector<32x4xf32>
    %4 = vector.shape_cast %3 : vector<32x4xf32> to vector<2x16x4xf32>
    %5 = tpu.transpose %4, [0, 2, 1] : vector<2x16x4xf32> -> vector<2x4x16xf32>
    %c0_4 = arith.constant 0 : index
    %c0_5 = arith.constant 0 : index
    %6 = vector.load %arg4[%c0_4, %c0_5] : memref<4x1xf32, #tpu.memory_space<vmem>>, vector<4x1xf32>
    %7 = vector.shape_cast %6 : vector<4x1xf32> to vector<1x4x1xf32>
    %8 = vector.broadcast %7 : vector<1x4x1xf32> to vector<2x4x16xf32>
    %9 = arith.addf %5, %8 : vector<2x4x16xf32>
    %c0_6 = arith.constant 0 : index
    %c0_7 = arith.constant 0 : index
    %c0_8 = arith.constant 0 : index
    %10 = vector.load %arg2[%c0_6, %c0_7, %c0_8] : memref<2x1x16xf32, #tpu.memory_space<vmem>>, vector<2x1x16xf32>
    %cst_9 = arith.constant 0.000000e+00 : f32
    %11 = vector.broadcast %cst_9 : f32 to vector<2x1x16xf32>
    %12 = arith.cmpf one, %10, %11 : vector<2x1x16xf32>
    %cst_10 = arith.constant -1.000000e+20 : f32
    %13 = vector.shape_cast %12 : vector<2x1x16xi1> to vector<2x1x16xi1>
    %14 = vector.broadcast %13 : vector<2x1x16xi1> to vector<2x4x16xi1>
    %15 = vector.broadcast %cst_10 : f32 to vector<2x4x16xf32>
    %16 = arith.select %14, %9, %15 : vector<2x4x16xi1>, vector<2x4x16xf32>
    %cst_11 = arith.constant dense<0xFF800000> : vector<2x4xf32>
    %17 = vector.multi_reduction <maximumf>, %16, %cst_11 [2] : vector<2x4x16xf32> to vector<2x4xf32>
    %18 = vector.shape_cast %17 : vector<2x4xf32> to vector<2x4x1xf32>
    %19 = vector.broadcast %18 : vector<2x4x1xf32> to vector<2x4x16xf32>
    %20 = arith.subf %16, %19 : vector<2x4x16xf32>
    %21 = math.exp %20 : vector<2x4x16xf32>
    %cst_12 = arith.constant dense<0.000000e+00> : vector<2x4xf32>
    %22 = vector.multi_reduction <add>, %21, %cst_12 [2] : vector<2x4x16xf32> to vector<2x4xf32>
    %23 = vector.shape_cast %22 : vector<2x4xf32> to vector<2x4x1xf32>
    %24 = vector.broadcast %23 : vector<2x4x1xf32> to vector<2x4x16xf32>
    %25 = arith.divf %21, %24 : vector<2x4x16xf32>
    "tpu.trace_start"() <{level = 10 : i32, message = "bhn,bnc->bhc"}> : () -> ()
    %cst_13 = arith.constant dense<0.000000e+00> : vector<2x4x32xf32>
    %26 = tpu.matmul %25, %0, %cst_13 {dimension_numbers = #tpu.dot_dimension_numbers<[2], [1], [1], [2], [0, 0, 0, 1, 1, 2], [0], [0]>} : vector<2x4x16xf32>, vector<2x16x32xf32>, vector<2x4x32xf32> -> vector<2x4x32xf32>
    "tpu.trace_stop"() : () -> ()
    %27 = vector.extract_strided_slice %26 {offsets = [0, 0, 0], sizes = [2, 1, 32], strides = [1, 1, 1]} : vector<2x4x32xf32> to vector<2x1x32xf32>
    %28 = vector.shape_cast %27 : vector<2x1x32xf32> to vector<2x32xf32>
    %c0_14 = arith.constant 0 : index
    %c0_15 = arith.constant 0 : index
    %c0_16 = arith.constant 0 : index
    %29 = vector.load %arg5[%c0_14, %c0_15, %c0_16] : memref<4x32x8xf32, #tpu.memory_space<vmem>>, vector<1x32x8xf32>
    %30 = vector.shape_cast %29 : vector<1x32x8xf32> to vector<32x8xf32>
    %cst_17 = arith.constant dense<0.000000e+00> : vector<2x8xf32>
    %31 = tpu.matmul %28, %30, %cst_17 {dimension_numbers = #tpu.dot_dimension_numbers<[1], [0], [0], [1], [0, 0, 1, 1], [], []>} : vector<2x32xf32>, vector<32x8xf32>, vector<2x8xf32> -> vector<2x8xf32>
    %c0_18 = arith.constant 0 : index
    %c0_19 = arith.constant 0 : index
    %32 = vector.load %arg6[%c0_18, %c0_19] : memref<4x8xf32, #tpu.memory_space<vmem>>, vector<1x8xf32>
    %33 = vector.broadcast %32 : vector<1x8xf32> to vector<2x8xf32>
    %34 = arith.addf %31, %33 : vector<2x8xf32>
    %c0_20 = arith.constant 0 : index
    %c0_21 = arith.constant 0 : index
    %35 = vector.load %arg7[%c0_20, %c0_21] : memref<2x32xf32, #tpu.memory_space<vmem>>, vector<2x8xf32>
    tpu.vector_store %arg7[%c0_20, %c0_21], %34 {strides = array<i32>} : memref<2x32xf32, #tpu.memory_space<vmem>>, vector<2x8xf32>,
    %36 = vector.extract_strided_slice %26 {offsets = [0, 1, 0], sizes = [2, 1, 32], strides = [1, 1, 1]} : vector<2x4x32xf32> to vector<2x1x32xf32>
    %37 = vector.shape_cast %36 : vector<2x1x32xf32> to vector<2x32xf32>
    %c1 = arith.constant 1 : index
    %c0_22 = arith.constant 0 : index
    %c0_23 = arith.constant 0 : index
    %38 = vector.load %arg5[%c1, %c0_22, %c0_23] : memref<4x32x8xf32, #tpu.memory_space<vmem>>, vector<1x32x8xf32>
    %39 = vector.shape_cast %38 : vector<1x32x8xf32> to vector<32x8xf32>
    %cst_24 = arith.constant dense<0.000000e+00> : vector<2x8xf32>
    %40 = tpu.matmul %37, %39, %cst_24 {dimension_numbers = #tpu.dot_dimension_numbers<[1], [0], [0], [1], [0, 0, 1, 1], [], []>} : vector<2x32xf32>, vector<32x8xf32>, vector<2x8xf32> -> vector<2x8xf32>
    %c1_25 = arith.constant 1 : index
    %c0_26 = arith.constant 0 : index
    %41 = vector.load %arg6[%c1_25, %c0_26] : memref<4x8xf32, #tpu.memory_space<vmem>>, vector<1x8xf32>
    %42 = vector.broadcast %41 : vector<1x8xf32> to vector<2x8xf32>
    %43 = arith.addf %40, %42 : vector<2x8xf32>
    %c0_27 = arith.constant 0 : index
    %c8 = arith.constant 8 : index
    %44 = vector.load %arg7[%c0_27, %c8] : memref<2x32xf32, #tpu.memory_space<vmem>>, vector<2x8xf32>
    tpu.vector_store %arg7[%c0_27, %c8], %43 {strides = array<i32>} : memref<2x32xf32, #tpu.memory_space<vmem>>, vector<2x8xf32>,
    %45 = vector.extract_strided_slice %26 {offsets = [0, 2, 0], sizes = [2, 1, 32], strides = [1, 1, 1]} : vector<2x4x32xf32> to vector<2x1x32xf32>
    %46 = vector.shape_cast %45 : vector<2x1x32xf32> to vector<2x32xf32>
    %c2 = arith.constant 2 : index
    %c0_28 = arith.constant 0 : index
    %c0_29 = arith.constant 0 : index
    %47 = vector.load %arg5[%c2, %c0_28, %c0_29] : memref<4x32x8xf32, #tpu.memory_space<vmem>>, vector<1x32x8xf32>
    %48 = vector.shape_cast %47 : vector<1x32x8xf32> to vector<32x8xf32>
    %cst_30 = arith.constant dense<0.000000e+00> : vector<2x8xf32>
    %49 = tpu.matmul %46, %48, %cst_30 {dimension_numbers = #tpu.dot_dimension_numbers<[1], [0], [0], [1], [0, 0, 1, 1], [], []>} : vector<2x32xf32>, vector<32x8xf32>, vector<2x8xf32> -> vector<2x8xf32>
    %c2_31 = arith.constant 2 : index
    %c0_32 = arith.constant 0 : index
    %50 = vector.load %arg6[%c2_31, %c0_32] : memref<4x8xf32, #tpu.memory_space<vmem>>, vector<1x8xf32>
    %51 = vector.broadcast %50 : vector<1x8xf32> to vector<2x8xf32>
    %52 = arith.addf %49, %51 : vector<2x8xf32>
    %c0_33 = arith.constant 0 : index
    %c16 = arith.constant 16 : index
    %53 = vector.load %arg7[%c0_33, %c16] : memref<2x32xf32, #tpu.memory_space<vmem>>, vector<2x8xf32>
    tpu.vector_store %arg7[%c0_33, %c16], %52 {strides = array<i32>} : memref<2x32xf32, #tpu.memory_space<vmem>>, vector<2x8xf32>,
    %54 = vector.extract_strided_slice %26 {offsets = [0, 3, 0], sizes = [2, 1, 32], strides = [1, 1, 1]} : vector<2x4x32xf32> to vector<2x1x32xf32>
    %55 = vector.shape_cast %54 : vector<2x1x32xf32> to vector<2x32xf32>
    %c3 = arith.constant 3 : index
    %c0_34 = arith.constant 0 : index
    %c0_35 = arith.constant 0 : index
    %56 = vector.load %arg5[%c3, %c0_34, %c0_35] : memref<4x32x8xf32, #tpu.memory_space<vmem>>, vector<1x32x8xf32>
    %57 = vector.shape_cast %56 : vector<1x32x8xf32> to vector<32x8xf32>
    %cst_36 = arith.constant dense<0.000000e+00> : vector<2x8xf32>
    %58 = tpu.matmul %55, %57, %cst_36 {dimension_numbers = #tpu.dot_dimension_numbers<[1], [0], [0], [1], [0, 0, 1, 1], [], []>} : vector<2x32xf32>, vector<32x8xf32>, vector<2x8xf32> -> vector<2x8xf32>
    %c3_37 = arith.constant 3 : index
    %c0_38 = arith.constant 0 : index
    %59 = vector.load %arg6[%c3_37, %c0_38] : memref<4x8xf32, #tpu.memory_space<vmem>>, vector<1x8xf32>
    %60 = vector.broadcast %59 : vector<1x8xf32> to vector<2x8xf32>
    %61 = arith.addf %58, %60 : vector<2x8xf32>
    %c0_39 = arith.constant 0 : index
    %c24 = arith.constant 24 : index
    %62 = vector.load %arg7[%c0_39, %c24] : memref<2x32xf32, #tpu.memory_space<vmem>>, vector<2x8xf32>
    tpu.vector_store %arg7[%c0_39, %c24], %61 {strides = array<i32>} : memref<2x32xf32, #tpu.memory_space<vmem>>, vector<2x8xf32>,
    return
  }
  func.func @transform_0(%arg0: i32) -> (i32, i32, i32) {
    %c0_i32 = arith.constant 0 : i32
    %c0_i32_0 = arith.constant 0 : i32
    %c0_i32_1 = arith.constant 0 : i32
    return %arg0, %c0_i32, %c0_i32_0 : i32, i32, i32
  }
  func.func @transform_1(%arg0: i32) -> (i32, i32, i32) {
    %c0_i32 = arith.constant 0 : i32
    %c0_i32_0 = arith.constant 0 : i32
    %c0_i32_1 = arith.constant 0 : i32
    return %arg0, %c0_i32, %c0_i32_0 : i32, i32, i32
  }
  func.func @transform_2(%arg0: i32) -> (i32, i32) {
    %c0_i32 = arith.constant 0 : i32
    %c0_i32_0 = arith.constant 0 : i32
    %c0_i32_1 = arith.constant 0 : i32
    return %c0_i32, %c0_i32_0 : i32, i32
  }
  func.func @transform_3(%arg0: i32) -> (i32, i32) {
    %c0_i32 = arith.constant 0 : i32
    %c0_i32_0 = arith.constant 0 : i32
    %c0_i32_1 = arith.constant 0 : i32
    return %c0_i32, %c0_i32_0 : i32, i32
  }
  func.func @transform_4(%arg0: i32) -> (i32, i32, i32) {
    %c0_i32 = arith.constant 0 : i32
    %c0_i32_0 = arith.constant 0 : i32
    %c0_i32_1 = arith.constant 0 : i32
    %c0_i32_2 = arith.constant 0 : i32
    return %c0_i32, %c0_i32_0, %c0_i32_1 : i32, i32, i32
  }
  func.func @transform_5(%arg0: i32) -> (i32, i32) {
    %c0_i32 = arith.constant 0 : i32
    %c0_i32_0 = arith.constant 0 : i32
    %c0_i32_1 = arith.constant 0 : i32
    return %c0_i32, %c0_i32_0 : i32, i32
  }
  func.func @transform_6(%arg0: i32) -> (i32, i32) {
    %c0_i32 = arith.constant 0 : i32
    %c0_i32_0 = arith.constant 0 : i32
    return %arg0, %c0_i32 : i32, i32
  }
}

</mosaic_0001>

<llo_original>
// kernel: tpu_custom_call.1
$region0: #{tpu_custom_call.1}
  #allocation0 [shape = 'u32[]', space=smem, size = 0x4, offset = 0x4, fixed_abs, tag = 'smem constant byte address 0x4 - core index']
  #allocation1 [shape = 'u32[144,128]{1,0:T(1,128)}', space=vmem, size = 0x12000, scoped, tag = 'internal scratch']
  %s0 = inlined_call_operand.vmem [shape: f32[2,16,32], index: 0, kind: input, shape index: {}]
  %s1 = inlined_call_operand.vmem [shape: f32[2,1,16], index: 1, kind: input, shape index: {}]
  %s2 = inlined_call_operand.vmem [shape: f32[32,4], index: 2, kind: input, shape index: {}]
  %s3 = inlined_call_operand.vmem [shape: f32[4,1], index: 3, kind: input, shape index: {}]
  %s4 = inlined_call_operand.vmem [shape: f32[4,32,8], index: 4, kind: input, shape index: {}]
  %s5 = inlined_call_operand.vmem [shape: f32[4,8], index: 5, kind: input, shape index: {}]
  %s6 = inlined_call_operand.hbm [shape: f32[2,32], index: 6, kind: output, shape index: {}]
  %s7 = sld [smem:[#allocation0]]
  $region34: #{tpu_custom_call.1} parent=0
    _
  %s9 = ssub.s32 1, %s7
  %s10 = scalar_select 0, %s9, %s7
  $region1: #{tpu_custom_call.1} parent=0
    #allocation2 [shape = 'u8[1024]{0}', space=vmem, size = 0x400, scoped, tag = 'output window, operand 0, single buffered']
    #allocation3 [shape = 's32[1]{0}', space=sflag, size = 0x4, scoped, tag = 'scoped memory for tpu_custom_call.1']
    %11 = vsyncpa [#allocation3], 0
    // Predicated region
    $region2: #{tpu_custom_call.1} parent=1 // pred_check
      _
    $region3: #{tpu_custom_call.1} parent=1 // pred_check_branch
      %13 = sbr.rel (0) target = $region5
    $region4: #{tpu_custom_call.1} parent=1 // pred_region
      _
    $region5: #{tpu_custom_call.1} parent=1 // pred_fallthru
      _
    // Predicated region
    $region6: #{tpu_custom_call.1} parent=1 // pred_check
      _
    $region7: #{tpu_custom_call.1} parent=1 // pred_check_branch
      %15 = sbr.rel (0) target = $region9
    $region8: #{tpu_custom_call.1} parent=1 // pred_region
      _
    $region9: #{tpu_custom_call.1} parent=1 // pred_fallthru
      _
    // Predicated region
    $region10: #{tpu_custom_call.1} parent=1 // pred_check
      _
    $region11: #{tpu_custom_call.1} parent=1 // pred_check_branch
      %17 = sbr.rel (0) target = $region13
    $region12: #{tpu_custom_call.1} parent=1 // pred_region
      _
    $region13: #{tpu_custom_call.1} parent=1 // pred_fallthru
      _
    // Predicated region
    $region14: #{tpu_custom_call.1} parent=1 // pred_check
      _
    $region15: #{tpu_custom_call.1} parent=1 // pred_check_branch
      %19 = sbr.rel (0) target = $region17
    $region16: #{tpu_custom_call.1} parent=1 // pred_region
      _
    $region17: #{tpu_custom_call.1} parent=1 // pred_fallthru
      _
    // Predicated region
    $region18: #{tpu_custom_call.1} parent=1 // pred_check
      _
    $region19: #{tpu_custom_call.1} parent=1 // pred_check_branch
      %21 = sbr.rel (0) target = $region21
    $region20: #{tpu_custom_call.1} parent=1 // pred_region
      _
    $region21: #{tpu_custom_call.1} parent=1 // pred_fallthru
      _
    // Predicated region
    $region22: #{tpu_custom_call.1} parent=1 // pred_check
      _
    $region23: #{tpu_custom_call.1} parent=1 // pred_check_branch
      %23 = sbr.rel (0) target = $region25
    $region24: #{tpu_custom_call.1} parent=1 // pred_region
      _
    $region25: #{tpu_custom_call.1} parent=1 // pred_fallthru
      _
    %v24 = vld [vmem:[%s0] sm:$0xff]
    %v25 = vld [vmem:[%s0 + $0x8] sm:$0xff]
    %v26 = vld [vmem:[%s0 + $0x10] sm:$0xff]
    %v27 = vld [vmem:[%s0 + $0x18] sm:$0xff]
    %v28 = vld [vmem:[%s2] sm:$0xff]
    %v29 = vld [vmem:[%s2 + $0x8] sm:$0xff]
    %v30 = vld [vmem:[%s2 + $0x10] sm:$0xff]
    %v31 = vld [vmem:[%s2 + $0x18] sm:$0xff]
    %vm32 = vcmask 261120
    %v34 = vsel %vm32, %v24, 0
    %v37 = vsel %vm32, %v25, 0
    %v40 = vsel %vm32, %v26, 0
    %v43 = vsel %vm32, %v27, 0
    %45 = vmatprep.subr.mxu0 0.0
    %46 = vmatpush1.msra.mxu0 0.0
    %47 = vmatprep.subr.mxu0 0.0
    %48 = vmatpush1.msra.mxu0 0.0
    %49 = vmatprep.subr.mxu0 0.0
    %50 = vmatpush1.msra.mxu0 0.0
    %51 = vmatprep.subr.mxu0 0.0
    %52 = vmatpush1.msra.mxu0 0.0
    %53 = vmatprep.subr.mxu0 0.0
    %54 = vmatpush1.msra.mxu0 0.0
    %55 = vmatprep.subr.mxu0 0.0
    %56 = vmatpush1.msra.mxu0 0.0
    %57 = vmatprep.subr.mxu0 0.0
    %58 = vmatpush1.msra.mxu0 0.0
    %59 = vmatprep.subr.mxu0 0.0
    %60 = vmatpush1.msra.mxu0 0.0
    %61 = vmatprep.subr.mxu0 0.0
    %62 = vmatpush1.msra.mxu0 0.0
    %63 = vmatprep.subr.mxu0 0.0
    %64 = vmatpush1.msra.mxu0 0.0
    %65 = vmatprep.subr.mxu0 0.0
    %66 = vmatpush1.msra.mxu0 0.0
    %67 = vmatprep.subr.mxu0 0.0
    %68 = vmatpush1.msra.mxu0 0.0
    %69 = vmatprep.subr.mxu0 0.0
    %70 = vmatpush1.msra.mxu0 %v31
    %71 = vmatprep.subr.mxu0 0.0
    %72 = vmatpush1.msra.mxu0 %v30
    %73 = vmatprep.subr.mxu0 0.0
    %74 = vmatpush1.msra.mxu0 %v29
    %75 = vmatprep.subr.mxu0 0.0
    %76 = vmatpush1.msra.mxu0 %v28
    %77 = vmatprep.subr.mxu0 0.0
    %78 = vmatpush2.msra.mxu0 0.0
    %79 = vmatprep.subr.mxu0 0.0
    %80 = vmatpush2.msra.mxu0 0.0
    %81 = vmatprep.subr.mxu0 0.0
    %82 = vmatpush2.msra.mxu0 0.0
    %83 = vmatprep.subr.mxu0 0.0
    %84 = vmatpush2.msra.mxu0 0.0
    %85 = vmatprep.subr.mxu0 0.0
    %86 = vmatpush2.msra.mxu0 0.0
    %87 = vmatprep.subr.mxu0 0.0
    %88 = vmatpush2.msra.mxu0 0.0
    %89 = vmatprep.subr.mxu0 0.0
    %90 = vmatpush2.msra.mxu0 0.0
    %91 = vmatprep.subr.mxu0 0.0
    %92 = vmatpush2.msra.mxu0 0.0
    %93 = vmatprep.subr.mxu0 0.0
    %94 = vmatpush2.msra.mxu0 0.0
    %95 = vmatprep.subr.mxu0 0.0
    %96 = vmatpush2.msra.mxu0 0.0
    %97 = vmatprep.subr.mxu0 0.0
    %98 = vmatpush2.msra.mxu0 0.0
    %99 = vmatprep.subr.mxu0 0.0
    %100 = vmatpush2.msra.mxu0 0.0
    %101 = vmatprep.subr.mxu0 0.0
    %102 = vmatpush2.msra.mxu0 0.0
    %103 = vmatprep.subr.mxu0 0.0
    %104 = vmatpush2.msra.mxu0 0.0
    %105 = vmatprep.subr.mxu0 0.0
    %106 = vmatpush2.msra.mxu0 0.0
    %107 = vmatprep.subr.mxu0 0.0
    %108 = vmatpush2.msra.mxu0 0.0
    %109 = vmatprep.mubr.f32.mxu0 0.0
    %110 = vmatmul.mubr.f32.gmra.mxu0 %v34
    %v111 = vpop.f32.mrf.mxu0
    %v112 = vadd.f32 0.0, %v111
    %v113 = vpop.f32.mrf.mxu0
    %114 = vmatprep.mubr.f32.mxu0 0.0
    %115 = vmatmul.mubr.f32.gmra.mxu0 %v37
    %v116 = vpop.f32.mrf.mxu0
    %v117 = vadd.f32 0.0, %v116
    %v118 = vpop.f32.mrf.mxu0
    %119 = vmatprep.mubr.f32.mxu0 0.0
    %120 = vmatmul.mubr.f32.gmra.mxu0 %v40
    %v121 = vpop.f32.mrf.mxu0
    %v122 = vadd.f32 0.0, %v121
    %v123 = vpop.f32.mrf.mxu0
    %124 = vmatprep.mubr.f32.mxu0 0.0
    %125 = vmatmul.mubr.f32.gmra.mxu0 %v43
    %v126 = vpop.f32.mrf.mxu0
    %v127 = vadd.f32 0.0, %v126
    %v128 = vpop.f32.mrf.mxu0
    %129 = vdwg.mxu0
    %130 = vxpose.xlu0.b32.start [1/16] %v112, 128
    %131 = vxpose.xlu0.b32.cont [2/16] %v117, 128
    %132 = vxpose.xlu0.b32.cont [3/16] 0.0, 128
    %133 = vxpose.xlu0.b32.cont [4/16] 0.0, 128
    %134 = vxpose.xlu0.b32.cont [5/16] 0.0, 128
    %135 = vxpose.xlu0.b32.cont [6/16] 0.0, 128
    %136 = vxpose.xlu0.b32.cont [7/16] 0.0, 128
    %137 = vxpose.xlu0.b32.cont [8/16] 0.0, 128
    %138 = vxpose.xlu0.b32.cont [9/16] 0.0, 128
    %139 = vxpose.xlu0.b32.cont [10/16] 0.0, 128
    %140 = vxpose.xlu0.b32.cont [11/16] 0.0, 128
    %141 = vxpose.xlu0.b32.cont [12/16] 0.0, 128
    %142 = vxpose.xlu0.b32.cont [13/16] 0.0, 128
    %143 = vxpose.xlu0.b32.cont [14/16] 0.0, 128
    %144 = vxpose.xlu0.b32.cont [15/16] 0.0, 128
    %145 = vxpose.xlu0.b32.end [16/16] 0.0, 128
    %v146 = vpop.trf.xlu0
    %v147 = vpop.trf.xlu0
    %v148 = vpop.trf.xlu0
    %v149 = vpop.trf.xlu0
    %v150 = vpop.trf.xlu0
    %v151 = vpop.trf.xlu0
    %v152 = vpop.trf.xlu0
    %v153 = vpop.trf.xlu0
    %v154 = vpop.trf.xlu0
    %v155 = vpop.trf.xlu0
    %v156 = vpop.trf.xlu0
    %v157 = vpop.trf.xlu0
    %v158 = vpop.trf.xlu0
    %v159 = vpop.trf.xlu0
    %v160 = vpop.trf.xlu0
    %v161 = vpop.trf.xlu0
    %162 = vxpose.xlu0.b32.start [1/16] %v122, 128
    %163 = vxpose.xlu0.b32.cont [2/16] %v127, 128
    %164 = vxpose.xlu0.b32.cont [3/16] 0.0, 128
    %165 = vxpose.xlu0.b32.cont [4/16] 0.0, 128
    %166 = vxpose.xlu0.b32.cont [5/16] 0.0, 128
    %167 = vxpose.xlu0.b32.cont [6/16] 0.0, 128
    %168 = vxpose.xlu0.b32.cont [7/16] 0.0, 128
    %169 = vxpose.xlu0.b32.cont [8/16] 0.0, 128
    %170 = vxpose.xlu0.b32.cont [9/16] 0.0, 128
    %171 = vxpose.xlu0.b32.cont [10/16] 0.0, 128
    %172 = vxpose.xlu0.b32.cont [11/16] 0.0, 128
    %173 = vxpose.xlu0.b32.cont [12/16] 0.0, 128
    %174 = vxpose.xlu0.b32.cont [13/16] 0.0, 128
    %175 = vxpose.xlu0.b32.cont [14/16] 0.0, 128
    %176 = vxpose.xlu0.b32.cont [15/16] 0.0, 128
    %177 = vxpose.xlu0.b32.end [16/16] 0.0, 128
    %v178 = vpop.trf.xlu0
    %v179 = vpop.trf.xlu0
    %v180 = vpop.trf.xlu0
    %v181 = vpop.trf.xlu0
    %v182 = vpop.trf.xlu0
    %v183 = vpop.trf.xlu0
    %v184 = vpop.trf.xlu0
    %v185 = vpop.trf.xlu0
    %v186 = vpop.trf.xlu0
    %v187 = vpop.trf.xlu0
    %v188 = vpop.trf.xlu0
    %v189 = vpop.trf.xlu0
    %v190 = vpop.trf.xlu0
    %v191 = vpop.trf.xlu0
    %v192 = vpop.trf.xlu0
    %v193 = vpop.trf.xlu0
    %v194 = vld [vmem:[%s3] sm:$0xf]
    %196 = vset.pattern.permute.xlu0 0
    %197 = vperm.xlu0 %196, %v194
    %v198 = vpop.permute.xlu0 %197
    %v200 = vadd.f32 %v146, %v198
    %v201 = vadd.f32 %v178, %v198
    %v202 = vld [vmem:[%s1] sm:$0x1]
    %v203 = vld [vmem:[%s1 + $0x1] sm:$0x1]
    %vm204 = vcmp.ne.f32.partialorder %v202, 0.0
    %vm205 = vcmp.ne.f32.partialorder %v203, 0.0
    %v206 = vsel %vm204, 1, 0
    %v207 = vsel %vm205, 1, 0
    %v208 = vlaneseq
    %v209 = vshrl.u32 %v208, 7
    %v210 = vsub.s32 0, %v209
    %v211 = vrot.slane %v206, %v210
    %v212 = vlaneseq
    %v213 = vshrl.u32 %v212, 7
    %v214 = vsub.s32 0, %v213
    %v215 = vrot.slane %v207, %v214
    %vm216 = vcmp.eq.s32.totalorder %v211, 1
    %vm217 = vcmp.eq.s32.totalorder %v215, 1
    %v218 = vsel %vm216, %v200, -1e+20
    %v219 = vsel %vm217, %v201, -1e+20
    %vm220 = vcmask 125952
    %v221 = vsel %vm220, %v218, -inf
    %222 = vmax.xlane.f32.xlu0 %v221
    %v223 = vpop.xlane.xlu0 %222
    %v224 = vsel %vm220, %v219, -inf
    %225 = vmax.xlane.f32.xlu0 %v224
    %v226 = vpop.xlane.xlu0 %225
    %v227 = vsub.f32 %v218, %v223
    %v228 = vsub.f32 %v219, %v226
    %v229 = vmul.f32 %v227, 1.442695
    %v230 = vpow.pop %v229
    %v231 = vmul.f32 %v228, 1.442695
    %v232 = vpow.pop %v231
    %v233 = vsel %vm220, %v230, 0.0
    %234 = vadd.xlane.f32.xlu0 %v233
    %v235 = vpop.xlane.xlu0 %234
    %v236 = vsel %vm220, %v232, 0.0
    %237 = vadd.xlane.f32.xlu0 %v236
    %v238 = vpop.xlane.xlu0 %237
    %v239 = vrcp.pop %v235
    %v240 = vmul.f32 %v230, %v239
    %v241 = vrcp.pop %v238
    %v242 = vmul.f32 %v232, %v241
    %vm243 = vcmask 130048
    %v245 = vsel %vm243, %v240, 0
    %247 = vmatprep.subr.mxu0 0.0
    %248 = vmatpush1.msra.mxu0 0.0
    %249 = vmatprep.subr.mxu0 0.0
    %250 = vmatpush1.msra.mxu0 0.0
    %251 = vmatprep.subr.mxu0 0.0
    %252 = vmatpush1.msra.mxu0 0.0
    %253 = vmatprep.subr.mxu0 0.0
    %254 = vmatpush1.msra.mxu0 0.0
    %255 = vmatprep.subr.mxu0 0.0
    %256 = vmatpush1.msra.mxu0 0.0
    %257 = vmatprep.subr.mxu0 0.0
    %258 = vmatpush1.msra.mxu0 0.0
    %259 = vmatprep.subr.mxu0 0.0
    %260 = vmatpush1.msra.mxu0 0.0
    %261 = vmatprep.subr.mxu0 0.0
    %262 = vmatpush1.msra.mxu0 0.0
    %263 = vmatprep.subr.mxu0 0.0
    %264 = vmatpush1.msra.mxu0 0.0
    %265 = vmatprep.subr.mxu0 0.0
    %266 = vmatpush1.msra.mxu0 0.0
    %267 = vmatprep.subr.mxu0 0.0
    %268 = vmatpush1.msra.mxu0 0.0
    %269 = vmatprep.subr.mxu0 0.0
    %270 = vmatpush1.msra.mxu0 0.0
    %271 = vmatprep.subr.mxu0 0.0
    %272 = vmatpush1.msra.mxu0 0.0
    %273 = vmatprep.subr.mxu0 0.0
    %274 = vmatpush1.msra.mxu0 0.0
    %275 = vmatprep.subr.mxu0 0.0
    %276 = vmatpush1.msra.mxu0 %v25
    %277 = vmatprep.subr.mxu0 0.0
    %278 = vmatpush1.msra.mxu0 %v24
    %279 = vmatprep.subr.mxu0 0.0
    %280 = vmatpush2.msra.mxu0 0.0
    %281 = vmatprep.subr.mxu0 0.0
    %282 = vmatpush2.msra.mxu0 0.0
    %283 = vmatprep.subr.mxu0 0.0
    %284 = vmatpush2.msra.mxu0 0.0
    %285 = vmatprep.subr.mxu0 0.0
    %286 = vmatpush2.msra.mxu0 0.0
    %287 = vmatprep.subr.mxu0 0.0
    %288 = vmatpush2.msra.mxu0 0.0
    %289 = vmatprep.subr.mxu0 0.0
    %290 = vmatpush2.msra.mxu0 0.0
    %291 = vmatprep.subr.mxu0 0.0
    %292 = vmatpush2.msra.mxu0 0.0
    %293 = vmatprep.subr.mxu0 0.0
    %294 = vmatpush2.msra.mxu0 0.0
    %295 = vmatprep.subr.mxu0 0.0
    %296 = vmatpush2.msra.mxu0 0.0
    %297 = vmatprep.subr.mxu0 0.0
    %298 = vmatpush2.msra.mxu0 0.0
    %299 = vmatprep.subr.mxu0 0.0
    %300 = vmatpush2.msra.mxu0 0.0
    %301 = vmatprep.subr.mxu0 0.0
    %302 = vmatpush2.msra.mxu0 0.0
    %303 = vmatprep.subr.mxu0 0.0
    %304 = vmatpush2.msra.mxu0 0.0
    %305 = vmatprep.subr.mxu0 0.0
    %306 = vmatpush2.msra.mxu0 0.0
    %307 = vmatprep.subr.mxu0 0.0
    %308 = vmatpush2.msra.mxu0 0.0
    %309 = vmatprep.subr.mxu0 0.0
    %310 = vmatpush2.msra.mxu0 0.0
    %311 = vmatprep.mubr.f32.mxu0 0.0
    %312 = vmatmul.mubr.f32.gmra.mxu0 %v245
    %v313 = vpop.f32.mrf.mxu0
    %v314 = vadd.f32 0.0, %v313
    %v315 = vpop.f32.mrf.mxu0
    %316 = vdwg.mxu0
    %v318 = vsel %vm243, %v242, 0
    %320 = vmatprep.subr.mxu0 0.0
    %321 = vmatpush1.msra.mxu0 0.0
    %322 = vmatprep.subr.mxu0 0.0
    %323 = vmatpush1.msra.mxu0 0.0
    %324 = vmatprep.subr.mxu0 0.0
    %325 = vmatpush1.msra.mxu0 0.0
    %326 = vmatprep.subr.mxu0 0.0
    %327 = vmatpush1.msra.mxu0 0.0
    %328 = vmatprep.subr.mxu0 0.0
    %329 = vmatpush1.msra.mxu0 0.0
    %330 = vmatprep.subr.mxu0 0.0
    %331 = vmatpush1.msra.mxu0 0.0
    %332 = vmatprep.subr.mxu0 0.0
    %333 = vmatpush1.msra.mxu0 0.0
    %334 = vmatprep.subr.mxu0 0.0
    %335 = vmatpush1.msra.mxu0 0.0
    %336 = vmatprep.subr.mxu0 0.0
    %337 = vmatpush1.msra.mxu0 0.0
    %338 = vmatprep.subr.mxu0 0.0
    %339 = vmatpush1.msra.mxu0 0.0
    %340 = vmatprep.subr.mxu0 0.0
    %341 = vmatpush1.msra.mxu0 0.0
    %342 = vmatprep.subr.mxu0 0.0
    %343 = vmatpush1.msra.mxu0 0.0
    %344 = vmatprep.subr.mxu0 0.0
    %345 = vmatpush1.msra.mxu0 0.0
    %346 = vmatprep.subr.mxu0 0.0
    %347 = vmatpush1.msra.mxu0 0.0
    %348 = vmatprep.subr.mxu0 0.0
    %349 = vmatpush1.msra.mxu0 %v27
    %350 = vmatprep.subr.mxu0 0.0
    %351 = vmatpush1.msra.mxu0 %v26
    %352 = vmatprep.subr.mxu0 0.0
    %353 = vmatpush2.msra.mxu0 0.0
    %354 = vmatprep.subr.mxu0 0.0
    %355 = vmatpush2.msra.mxu0 0.0
    %356 = vmatprep.subr.mxu0 0.0
    %357 = vmatpush2.msra.mxu0 0.0
    %358 = vmatprep.subr.mxu0 0.0
    %359 = vmatpush2.msra.mxu0 0.0
    %360 = vmatprep.subr.mxu0 0.0
    %361 = vmatpush2.msra.mxu0 0.0
    %362 = vmatprep.subr.mxu0 0.0
    %363 = vmatpush2.msra.mxu0 0.0
    %364 = vmatprep.subr.mxu0 0.0
    %365 = vmatpush2.msra.mxu0 0.0
    %366 = vmatprep.subr.mxu0 0.0
    %367 = vmatpush2.msra.mxu0 0.0
    %368 = vmatprep.subr.mxu0 0.0
    %369 = vmatpush2.msra.mxu0 0.0
    %370 = vmatprep.subr.mxu0 0.0
    %371 = vmatpush2.msra.mxu0 0.0
    %372 = vmatprep.subr.mxu0 0.0
    %373 = vmatpush2.msra.mxu0 0.0
    %374 = vmatprep.subr.mxu0 0.0
    %375 = vmatpush2.msra.mxu0 0.0
    %376 = vmatprep.subr.mxu0 0.0
    %377 = vmatpush2.msra.mxu0 0.0
    %378 = vmatprep.subr.mxu0 0.0
    %379 = vmatpush2.msra.mxu0 0.0
    %380 = vmatprep.subr.mxu0 0.0
    %381 = vmatpush2.msra.mxu0 0.0
    %382 = vmatprep.subr.mxu0 0.0
    %383 = vmatpush2.msra.mxu0 0.0
    %384 = vmatprep.mubr.f32.mxu0 0.0
    %385 = vmatmul.mubr.f32.gmra.mxu0 %v318
    %v386 = vpop.f32.mrf.mxu0
    %v387 = vadd.f32 0.0, %v386
    %v388 = vpop.f32.mrf.mxu0
    %389 = vdwg.mxu0
    %v390 = vld [vmem:[%s4] sm:$0xff]
    %v391 = vld [vmem:[%s4 + $0x8] sm:$0xff]
    %v392 = vld [vmem:[%s4 + $0x10] sm:$0xff]
    %v393 = vld [vmem:[%s4 + $0x18] sm:$0xff]
    %v394 = vld [vmem:[%s5] sm:$0x1]
    %v395 = vlaneseq
    %v396 = vshrl.u32 %v395, 7
    %v397 = vsub.s32 0, %v396
    %v398 = vrot.slane %v394, %v397
    %v401 = vrot.slane %v387, 7
    %vm402 = vcmask 1041409
    %v403 = vsel %vm402, %v401, %v314
    %v404 = vsel %vm32, %v403, 0
    %406 = vmatprep.subr.mxu0 0.0
    %407 = vmatpush1.msra.mxu0 0.0
    %408 = vmatprep.subr.mxu0 0.0
    %409 = vmatpush1.msra.mxu0 0.0
    %410 = vmatprep.subr.mxu0 0.0
    %411 = vmatpush1.msra.mxu0 0.0
    %412 = vmatprep.subr.mxu0 0.0
    %413 = vmatpush1.msra.mxu0 0.0
    %414 = vmatprep.subr.mxu0 0.0
    %415 = vmatpush1.msra.mxu0 0.0
    %416 = vmatprep.subr.mxu0 0.0
    %417 = vmatpush1.msra.mxu0 0.0
    %418 = vmatprep.subr.mxu0 0.0
    %419 = vmatpush1.msra.mxu0 0.0
    %420 = vmatprep.subr.mxu0 0.0
    %421 = vmatpush1.msra.mxu0 0.0
    %422 = vmatprep.subr.mxu0 0.0
    %423 = vmatpush1.msra.mxu0 0.0
    %424 = vmatprep.subr.mxu0 0.0
    %425 = vmatpush1.msra.mxu0 0.0
    %426 = vmatprep.subr.mxu0 0.0
    %427 = vmatpush1.msra.mxu0 0.0
    %428 = vmatprep.subr.mxu0 0.0
    %429 = vmatpush1.msra.mxu0 0.0
    %430 = vmatprep.subr.mxu0 0.0
    %431 = vmatpush1.msra.mxu0 %v393
    %432 = vmatprep.subr.mxu0 0.0
    %433 = vmatpush1.msra.mxu0 %v392
    %434 = vmatprep.subr.mxu0 0.0
    %435 = vmatpush1.msra.mxu0 %v391
    %436 = vmatprep.subr.mxu0 0.0
    %437 = vmatpush1.msra.mxu0 %v390
    %438 = vmatprep.subr.mxu0 0.0
    %439 = vmatpush2.msra.mxu0 0.0
    %440 = vmatprep.subr.mxu0 0.0
    %441 = vmatpush2.msra.mxu0 0.0
    %442 = vmatprep.subr.mxu0 0.0
    %443 = vmatpush2.msra.mxu0 0.0
    %444 = vmatprep.subr.mxu0 0.0
    %445 = vmatpush2.msra.mxu0 0.0
    %446 = vmatprep.subr.mxu0 0.0
    %447 = vmatpush2.msra.mxu0 0.0
    %448 = vmatprep.subr.mxu0 0.0
    %449 = vmatpush2.msra.mxu0 0.0
    %450 = vmatprep.subr.mxu0 0.0
    %451 = vmatpush2.msra.mxu0 0.0
    %452 = vmatprep.subr.mxu0 0.0
    %453 = vmatpush2.msra.mxu0 0.0
    %454 = vmatprep.subr.mxu0 0.0
    %455 = vmatpush2.msra.mxu0 0.0
    %456 = vmatprep.subr.mxu0 0.0
    %457 = vmatpush2.msra.mxu0 0.0
    %458 = vmatprep.subr.mxu0 0.0
    %459 = vmatpush2.msra.mxu0 0.0
    %460 = vmatprep.subr.mxu0 0.0
    %461 = vmatpush2.msra.mxu0 0.0
    %462 = vmatprep.subr.mxu0 0.0
    %463 = vmatpush2.msra.mxu0 0.0
    %464 = vmatprep.subr.mxu0 0.0
    %465 = vmatpush2.msra.mxu0 0.0
    %466 = vmatprep.subr.mxu0 0.0
    %467 = vmatpush2.msra.mxu0 0.0
    %468 = vmatprep.subr.mxu0 0.0
    %469 = vmatpush2.msra.mxu0 0.0
    %470 = vmatprep.mubr.f32.mxu0 0.0
    %471 = vmatmul.mubr.f32.gmra.mxu0 %v404
    %v472 = vpop.f32.mrf.mxu0
    %v473 = vadd.f32 %v398, %v472
    %v474 = vpop.f32.mrf.mxu0
    %475 = vdwg.mxu0
    %vm476 = vcmask 58368
    %477 = vst.msk [vmem:[#allocation2] sm:$0x3] %vm476, %v473
    %s478 = scalar_lea.vmem %s4, 32
    %v479 = vld [vmem:[%s478] sm:$0xff]
    %v480 = vld [vmem:[%s478 + $0x8] sm:$0xff]
    %v481 = vld [vmem:[%s478 + $0x10] sm:$0xff]
    %v482 = vld [vmem:[%s478 + $0x18] sm:$0xff]
    %v483 = vld [vmem:[%s5 + $0x1] sm:$0x1]
    %v484 = vlaneseq
    %v485 = vshrl.u32 %v484, 7
    %v486 = vsub.s32 0, %v485
    %v487 = vrot.slane %v483, %v486
    %v488 = vrot.slane %v314, 1
    %v489 = vsel %vm402, %v387, %v488
    %v490 = vsel %vm32, %v489, 0
    %492 = vmatprep.subr.mxu0 0.0
    %493 = vmatpush1.msra.mxu0 0.0
    %494 = vmatprep.subr.mxu0 0.0
    %495 = vmatpush1.msra.mxu0 0.0
    %496 = vmatprep.subr.mxu0 0.0
    %497 = vmatpush1.msra.mxu0 0.0
    %498 = vmatprep.subr.mxu0 0.0
    %499 = vmatpush1.msra.mxu0 0.0
    %500 = vmatprep.subr.mxu0 0.0
    %501 = vmatpush1.msra.mxu0 0.0
    %502 = vmatprep.subr.mxu0 0.0
    %503 = vmatpush1.msra.mxu0 0.0
    %504 = vmatprep.subr.mxu0 0.0
    %505 = vmatpush1.msra.mxu0 0.0
    %506 = vmatprep.subr.mxu0 0.0
    %507 = vmatpush1.msra.mxu0 0.0
    %508 = vmatprep.subr.mxu0 0.0
    %509 = vmatpush1.msra.mxu0 0.0
    %510 = vmatprep.subr.mxu0 0.0
    %511 = vmatpush1.msra.mxu0 0.0
    %512 = vmatprep.subr.mxu0 0.0
    %513 = vmatpush1.msra.mxu0 0.0
    %514 = vmatprep.subr.mxu0 0.0
    %515 = vmatpush1.msra.mxu0 0.0
    %516 = vmatprep.subr.mxu0 0.0
    %517 = vmatpush1.msra.mxu0 %v482
    %518 = vmatprep.subr.mxu0 0.0
    %519 = vmatpush1.msra.mxu0 %v481
    %520 = vmatprep.subr.mxu0 0.0
    %521 = vmatpush1.msra.mxu0 %v480
    %522 = vmatprep.subr.mxu0 0.0
    %523 = vmatpush1.msra.mxu0 %v479
    %524 = vmatprep.subr.mxu0 0.0
    %525 = vmatpush2.msra.mxu0 0.0
    %526 = vmatprep.subr.mxu0 0.0
    %527 = vmatpush2.msra.mxu0 0.0
    %528 = vmatprep.subr.mxu0 0.0
    %529 = vmatpush2.msra.mxu0 0.0
    %530 = vmatprep.subr.mxu0 0.0
    %531 = vmatpush2.msra.mxu0 0.0
    %532 = vmatprep.subr.mxu0 0.0
    %533 = vmatpush2.msra.mxu0 0.0
    %534 = vmatprep.subr.mxu0 0.0
    %535 = vmatpush2.msra.mxu0 0.0
    %536 = vmatprep.subr.mxu0 0.0
    %537 = vmatpush2.msra.mxu0 0.0
    %538 = vmatprep.subr.mxu0 0.0
    %539 = vmatpush2.msra.mxu0 0.0
    %540 = vmatprep.subr.mxu0 0.0
    %541 = vmatpush2.msra.mxu0 0.0
    %542 = vmatprep.subr.mxu0 0.0
    %543 = vmatpush2.msra.mxu0 0.0
    %544 = vmatprep.subr.mxu0 0.0
    %545 = vmatpush2.msra.mxu0 0.0
    %546 = vmatprep.subr.mxu0 0.0
    %547 = vmatpush2.msra.mxu0 0.0
    %548 = vmatprep.subr.mxu0 0.0
    %549 = vmatpush2.msra.mxu0 0.0
    %550 = vmatprep.subr.mxu0 0.0
    %551 = vmatpush2.msra.mxu0 0.0
    %552 = vmatprep.subr.mxu0 0.0
    %553 = vmatpush2.msra.mxu0 0.0
    %554 = vmatprep.subr.mxu0 0.0
    %555 = vmatpush2.msra.mxu0 0.0
    %556 = vmatprep.mubr.f32.mxu0 0.0
    %557 = vmatmul.mubr.f32.gmra.mxu0 %v490
    %v558 = vpop.f32.mrf.mxu0
    %v559 = vadd.f32 %v487, %v558
    %v560 = vpop.f32.mrf.mxu0
    %561 = vdwg.mxu0
    %563 = vrot.lane.b32.xlu0 %v559, 8
    %v564 = vpop.permute.xlu0 %563
    %vm566 = vcmask 123968
    %567 = vst.msk [vmem:[#allocation2] sm:$0x3] %vm566, %v564
    %s568 = scalar_lea.vmem %s4, 64
    %v569 = vld [vmem:[%s568] sm:$0xff]
    %v570 = vld [vmem:[%s568 + $0x8] sm:$0xff]
    %v571 = vld [vmem:[%s568 + $0x10] sm:$0xff]
    %v572 = vld [vmem:[%s568 + $0x18] sm:$0xff]
    %v573 = vld [vmem:[%s5 + $0x2] sm:$0x1]
    %v574 = vlaneseq
    %v575 = vshrl.u32 %v574, 7
    %v576 = vsub.s32 0, %v575
    %v577 = vrot.slane %v573, %v576
    %v578 = vrot.slane %v314, 2
    %v579 = vrot.slane %v387, 1
    %v580 = vsel %vm402, %v579, %v578
    %v581 = vsel %vm32, %v580, 0
    %583 = vmatprep.subr.mxu0 0.0
    %584 = vmatpush1.msra.mxu0 0.0
    %585 = vmatprep.subr.mxu0 0.0
    %586 = vmatpush1.msra.mxu0 0.0
    %587 = vmatprep.subr.mxu0 0.0
    %588 = vmatpush1.msra.mxu0 0.0
    %589 = vmatprep.subr.mxu0 0.0
    %590 = vmatpush1.msra.mxu0 0.0
    %591 = vmatprep.subr.mxu0 0.0
    %592 = vmatpush1.msra.mxu0 0.0
    %593 = vmatprep.subr.mxu0 0.0
    %594 = vmatpush1.msra.mxu0 0.0
    %595 = vmatprep.subr.mxu0 0.0
    %596 = vmatpush1.msra.mxu0 0.0
    %597 = vmatprep.subr.mxu0 0.0
    %598 = vmatpush1.msra.mxu0 0.0
    %599 = vmatprep.subr.mxu0 0.0
    %600 = vmatpush1.msra.mxu0 0.0
    %601 = vmatprep.subr.mxu0 0.0
    %602 = vmatpush1.msra.mxu0 0.0
    %603 = vmatprep.subr.mxu0 0.0
    %604 = vmatpush1.msra.mxu0 0.0
    %605 = vmatprep.subr.mxu0 0.0
    %606 = vmatpush1.msra.mxu0 0.0
    %607 = vmatprep.subr.mxu0 0.0
    %608 = vmatpush1.msra.mxu0 %v572
    %609 = vmatprep.subr.mxu0 0.0
    %610 = vmatpush1.msra.mxu0 %v571
    %611 = vmatprep.subr.mxu0 0.0
    %612 = vmatpush1.msra.mxu0 %v570
    %613 = vmatprep.subr.mxu0 0.0
    %614 = vmatpush1.msra.mxu0 %v569
    %615 = vmatprep.subr.mxu0 0.0
    %616 = vmatpush2.msra.mxu0 0.0
    %617 = vmatprep.subr.mxu0 0.0
    %618 = vmatpush2.msra.mxu0 0.0
    %619 = vmatprep.subr.mxu0 0.0
    %620 = vmatpush2.msra.mxu0 0.0
    %621 = vmatprep.subr.mxu0 0.0
    %622 = vmatpush2.msra.mxu0 0.0
    %623 = vmatprep.subr.mxu0 0.0
    %624 = vmatpush2.msra.mxu0 0.0
    %625 = vmatprep.subr.mxu0 0.0
    %626 = vmatpush2.msra.mxu0 0.0
    %627 = vmatprep.subr.mxu0 0.0
    %628 = vmatpush2.msra.mxu0 0.0
    %629 = vmatprep.subr.mxu0 0.0
    %630 = vmatpush2.msra.mxu0 0.0
    %631 = vmatprep.subr.mxu0 0.0
    %632 = vmatpush2.msra.mxu0 0.0
    %633 = vmatprep.subr.mxu0 0.0
    %634 = vmatpush2.msra.mxu0 0.0
    %635 = vmatprep.subr.mxu0 0.0
    %636 = vmatpush2.msra.mxu0 0.0
    %637 = vmatprep.subr.mxu0 0.0
    %638 = vmatpush2.msra.mxu0 0.0
    %639 = vmatprep.subr.mxu0 0.0
    %640 = vmatpush2.msra.mxu0 0.0
    %641 = vmatprep.subr.mxu0 0.0
    %642 = vmatpush2.msra.mxu0 0.0
    %643 = vmatprep.subr.mxu0 0.0
    %644 = vmatpush2.msra.mxu0 0.0
    %645 = vmatprep.subr.mxu0 0.0
    %646 = vmatpush2.msra.mxu0 0.0
    %647 = vmatprep.mubr.f32.mxu0 0.0
    %648 = vmatmul.mubr.f32.gmra.mxu0 %v581
    %v649 = vpop.f32.mrf.mxu0
    %v650 = vadd.f32 %v577, %v649
    %v651 = vpop.f32.mrf.mxu0
    %652 = vdwg.mxu0
    %654 = vrot.lane.b32.xlu0 %v650, 16
    %v655 = vpop.permute.xlu0 %654
    %vm657 = vcmask 189568
    %658 = vst.msk [vmem:[#allocation2] sm:$0x3] %vm657, %v655
    %s659 = scalar_lea.vmem %s4, 96
    %v660 = vld [vmem:[%s659] sm:$0xff]
    %v661 = vld [vmem:[%s659 + $0x8] sm:$0xff]
    %v662 = vld [vmem:[%s659 + $0x10] sm:$0xff]
    %v663 = vld [vmem:[%s659 + $0x18] sm:$0xff]
    %v664 = vld [vmem:[%s5 + $0x3] sm:$0x1]
    %v665 = vlaneseq
    %v666 = vshrl.u32 %v665, 7
    %v667 = vsub.s32 0, %v666
    %v668 = vrot.slane %v664, %v667
    %v669 = vrot.slane %v314, 3
    %v670 = vrot.slane %v387, 2
    %v671 = vsel %vm402, %v670, %v669
    %v672 = vsel %vm32, %v671, 0
    %674 = vmatprep.subr.mxu0 0.0
    %675 = vmatpush1.msra.mxu0 0.0
    %676 = vmatprep.subr.mxu0 0.0
    %677 = vmatpush1.msra.mxu0 0.0
    %678 = vmatprep.subr.mxu0 0.0
    %679 = vmatpush1.msra.mxu0 0.0
    %680 = vmatprep.subr.mxu0 0.0
    %681 = vmatpush1.msra.mxu0 0.0
    %682 = vmatprep.subr.mxu0 0.0
    %683 = vmatpush1.msra.mxu0 0.0
    %684 = vmatprep.subr.mxu0 0.0
    %685 = vmatpush1.msra.mxu0 0.0
    %686 = vmatprep.subr.mxu0 0.0
    %687 = vmatpush1.msra.mxu0 0.0
    %688 = vmatprep.subr.mxu0 0.0
    %689 = vmatpush1.msra.mxu0 0.0
    %690 = vmatprep.subr.mxu0 0.0
    %691 = vmatpush1.msra.mxu0 0.0
    %692 = vmatprep.subr.mxu0 0.0
    %693 = vmatpush1.msra.mxu0 0.0
    %694 = vmatprep.subr.mxu0 0.0
    %695 = vmatpush1.msra.mxu0 0.0
    %696 = vmatprep.subr.mxu0 0.0
    %697 = vmatpush1.msra.mxu0 0.0
    %698 = vmatprep.subr.mxu0 0.0
    %699 = vmatpush1.msra.mxu0 %v663
    %700 = vmatprep.subr.mxu0 0.0
    %701 = vmatpush1.msra.mxu0 %v662
    %702 = vmatprep.subr.mxu0 0.0
    %703 = vmatpush1.msra.mxu0 %v661
    %704 = vmatprep.subr.mxu0 0.0
    %705 = vmatpush1.msra.mxu0 %v660
    %706 = vmatprep.subr.mxu0 0.0
    %707 = vmatpush2.msra.mxu0 0.0
    %708 = vmatprep.subr.mxu0 0.0
    %709 = vmatpush2.msra.mxu0 0.0
    %710 = vmatprep.subr.mxu0 0.0
    %711 = vmatpush2.msra.mxu0 0.0
    %712 = vmatprep.subr.mxu0 0.0
    %713 = vmatpush2.msra.mxu0 0.0
    %714 = vmatprep.subr.mxu0 0.0
    %715 = vmatpush2.msra.mxu0 0.0
    %716 = vmatprep.subr.mxu0 0.0
    %717 = vmatpush2.msra.mxu0 0.0
    %718 = vmatprep.subr.mxu0 0.0
    %719 = vmatpush2.msra.mxu0 0.0
    %720 = vmatprep.subr.mxu0 0.0
    %721 = vmatpush2.msra.mxu0 0.0
    %722 = vmatprep.subr.mxu0 0.0
    %723 = vmatpush2.msra.mxu0 0.0
    %724 = vmatprep.subr.mxu0 0.0
    %725 = vmatpush2.msra.mxu0 0.0
    %726 = vmatprep.subr.mxu0 0.0
    %727 = vmatpush2.msra.mxu0 0.0
    %728 = vmatprep.subr.mxu0 0.0
    %729 = vmatpush2.msra.mxu0 0.0
    %730 = vmatprep.subr.mxu0 0.0
    %731 = vmatpush2.msra.mxu0 0.0
    %732 = vmatprep.subr.mxu0 0.0
    %733 = vmatpush2.msra.mxu0 0.0
    %734 = vmatprep.subr.mxu0 0.0
    %735 = vmatpush2.msra.mxu0 0.0
    %736 = vmatprep.subr.mxu0 0.0
    %737 = vmatpush2.msra.mxu0 0.0
    %738 = vmatprep.mubr.f32.mxu0 0.0
    %739 = vmatmul.mubr.f32.gmra.mxu0 %v672
    %v740 = vpop.f32.mrf.mxu0
    %v741 = vadd.f32 %v668, %v740
    %v742 = vpop.f32.mrf.mxu0
    %743 = vdwg.mxu0
    %745 = vrot.lane.b32.xlu0 %v741, 24
    %v746 = vpop.permute.xlu0 %745
    %vm748 = vcmask 255168
    %749 = vst.msk [vmem:[#allocation2] sm:$0x3] %vm748, %v746
    // Predicated region
    $region26: #{tpu_custom_call.1} parent=1 // pred_check
      _
    $region27: #{tpu_custom_call.1} parent=1 // pred_check_branch
      %751 = sbr.rel (0) target = $region29
    $region28: #{tpu_custom_call.1} parent=1 // pred_region
      %s753 = ssub.s32 32, 32
      %754 = vsyncadd [#allocation3], %s753
      %s756 = sshll.u32 [#allocation2], 4
      %s757 = int_to_ptr.vmem [resolvable:$true] %s756
      %759 = dma.vmem_to_hbm [thread:$0]  %s757, 32, %s6, [#allocation3]
    $region29: #{tpu_custom_call.1} parent=1 // pred_fallthru
      _
    // Predicated region
    $region30: #{tpu_custom_call.1} parent=1 // pred_check
      _
    $region31: #{tpu_custom_call.1} parent=1 // pred_check_branch
      %761 = sbr.rel (0) target = $region33
    $region32: #{tpu_custom_call.1} parent=1 // pred_region
      %762 = dma.done [#allocation3], 32
    $region33: #{tpu_custom_call.1} parent=1 // pred_fallthru
      _
    %763 = vsyncpa [#allocation3], 1

</llo_original>
